<compile_context>
chip_gen: v5e
topology: v5e:2x2
jax: 0.10.0
libtpu: 0.0.40
codegen_flags: <defaults>
</compile_context>

<pallas_src>
import math
from functools import partial

import jax
import jax.numpy as jnp
from jax.experimental import pallas as pl
from jax.experimental.pallas import tpu as pltpu

_LANE = 128
_SUBLANE = 8


def B(rho):
    return 0.0 if rho == 1 else (math.sqrt(1 - (rho - 1) ** 2) - 1) / (rho - 1)


def _round_up(n, m):
    return ((n + m - 1) // m) * m


def _densenet2_kernel(*refs, num_hidden, b, compute_dtype):
    # refs = (x_ref, w_1, ..., w_H, w_readout, o_ref); weights are (in, out).
    x_ref = refs[0]
    w_refs = refs[1:2 + num_hidden]
    o_ref = refs[2 + num_hidden]

    h = x_ref[...]                                     # already compute_dtype
    # hidden layers: Linear (no bias) followed by ABReLU
    for li in range(num_hidden):
        h = jnp.dot(h, w_refs[li][...], preferred_element_type=jnp.float32)
        if b == 0.0:
            h = jnp.maximum(h, 0.0)                        # rho == 1 -> ReLU
        else:
            h = jnp.where(h > 0.0, h, jnp.float32(b) * h)  # ABReLU
        h = h.astype(compute_dtype)                        # no-op for f32
    # readout: Linear (no bias), no activation
    out = jnp.dot(h, w_refs[-1][...], preferred_element_type=jnp.float32)
    o_ref[...] = out.astype(o_ref.dtype)


def prepare_densenet2_weights(weights, dtype=jnp.float32):
    """One-time conversion (do NOT redo per forward call): PyTorch-layout
    (out, in) matrices -> (in, out), zero-padded so both feature dims are
    multiples of 128 (lane-dense MXU operands + lane-dense output store).
    Pass dtype=jnp.bfloat16 to halve weight VMEM/HBM traffic on v6e/v7x."""
    prepped = []
    for w in weights:
        wt = jnp.asarray(w, jnp.float32).T               # (in, out)
        in_d, out_d = wt.shape
        in_p = _round_up(in_d, _LANE)
        out_p = _round_up(out_d, _LANE)
        wp = jnp.zeros((in_p, out_p), jnp.float32).at[:in_d, :out_d].set(wt)
        prepped.append(wp.astype(dtype))
    return tuple(prepped)


def densenet2_forward(x, prepped_wts, outp_dim, *, rho=1, block_batch=None):
    """x: [..., inp_dim]; prepped_wts from prepare_densenet2_weights
    (hidden layers first, readout last).  Returns [..., outp_dim] f32."""
    b = B(rho)
    num_hidden = len(prepped_wts) - 1
    compute_dtype = prepped_wts[0].dtype

    lead_shape = x.shape[:-1]
    inp_dim = x.shape[-1]
    x2 = jnp.asarray(x, jnp.float32).reshape(-1, inp_dim)
    n_rows = x2.shape[0]

    in_p = prepped_wts[0].shape[0]
    out_p = prepped_wts[-1].shape[1]

    # Batch tile: multiples of 128 once the batch is large enough (MXU
    # M-alignment, amortizes per-grid-step overhead), otherwise a single
    # sublane-aligned tile.
    if block_batch is not None:
        tb = block_batch
    elif n_rows >= 256:
        tb = 256
    else:
        tb = _round_up(max(n_rows, 1), _SUBLANE)
    pb = _round_up(n_rows, tb)

    # Pad rows to a multiple of the tile and features to the padded weight
    # dim; feed x in the compute dtype so the x DMA / MXU operand match the
    # weight dtype (halved traffic in the bf16 configuration).
    xp = (jnp.zeros((pb, in_p), jnp.float32)
          .at[:n_rows, :inp_dim].set(x2)
          .astype(compute_dtype))

    kernel = partial(_densenet2_kernel, num_hidden=num_hidden, b=b,
                     compute_dtype=compute_dtype)

    # VMEM budget: resident weights (x2 buffering slack) + double-buffered
    # x / out tiles + activation temporaries + slack.  For weight stacks that
    # do not fit VMEM (v7x: 64 MiB) prepare weights in bf16.
    # TODO(synk): HBM-resident weights with manual make_async_copy per-layer
    # prefetch for weight stacks that exceed VMEM even in bf16.
    w_itemsize = jnp.dtype(compute_dtype).itemsize
    weight_bytes = sum(int(w.size) * w_itemsize for w in prepped_wts)
    max_feat = max([w.shape[1] for w in prepped_wts] + [in_p])
    budget = (2 * weight_bytes
              + 2 * tb * in_p * w_itemsize + 2 * tb * out_p * 4
              + 2 * tb * max_feat * 4
              + (4 << 20))
    vmem_limit = int(max(budget, 16 << 20))

    grid = (pb // tb,)
    x_spec = pl.BlockSpec((tb, in_p), lambda i: (i, 0))
    # Constant index_map -> weights stay VMEM-resident across grid steps.
    w_specs = [pl.BlockSpec(tuple(w.shape), lambda i: (0, 0))
               for w in prepped_wts]
    out_spec = pl.BlockSpec((tb, out_p), lambda i: (i, 0))

    out_padded = pl.pallas_call(
        kernel,
        out_shape=jax.ShapeDtypeStruct((pb, out_p), jnp.float32),
        grid=grid,
        in_specs=[x_spec] + w_specs,
        out_specs=out_spec,
        compiler_params=pltpu.CompilerParams(
            dimension_semantics=("parallel",),
            vmem_limit_bytes=vmem_limit),
    )(xp, *prepped_wts)

    out = out_padded[:n_rows, :outp_dim]
    return out.reshape(*lead_shape, outp_dim)


def densenet2_reference(x, weights, *, rho=1):
    """Pure-JAX reference matching the PyTorch module (bias=False,
    piecewise_linear nonlinearity)."""
    b = B(rho)
    lead_shape = x.shape[:-1]
    h = jnp.asarray(x, jnp.float32).reshape(-1, x.shape[-1])
    for w in weights[:-1]:
        h = h @ jnp.asarray(w, jnp.float32).T
        h = b * jnp.minimum(h, 0.0) + jnp.maximum(h, 0.0)
    h = h @ jnp.asarray(weights[-1], jnp.float32).T
    return h.reshape(*lead_shape, h.shape[-1])


def init_densenet2_params(key, inp_dim, hdims, outp_dim, rho=1,
                          linear_readout=False):
    """Deterministic parameter init mirroring DenseNet2.__init__ shapes/std
    (piecewise_linear nonlinearity, bias=False)."""
    weights = []
    dims_in = [inp_dim] + hdims[:-1]
    last_out = inp_dim
    for _in, _out in zip(dims_in, hdims):
        key, sub = jax.random.split(key)
        std = math.sqrt(2.0 / ((B(rho) - 1.0) ** 2 * _in))
        weights.append(std * jax.random.normal(sub, (_out, _in), jnp.float32))
        last_out = _out
    ro_in = hdims[-1] if len(hdims) > 0 else inp_dim
    if linear_readout:
        weights.append(jnp.zeros((outp_dim, ro_in), jnp.float32))
    else:
        key, sub = jax.random.split(key)
        std = math.sqrt(2.0 / ((B(rho) - 1.0) ** 2 * last_out))
        weights.append(std * jax.random.normal(sub, (outp_dim, ro_in),
                                               jnp.float32))
    return weights


if __name__ == "__main__":
    key = jax.random.PRNGKey(0)

    batch, inp_dim, hdims, outp_dim = 8, 16, [32, 32], 1

    key, kx = jax.random.split(key)
    x = jax.random.normal(kx, (batch, inp_dim), jnp.float32)

    # exercise both the ReLU (b=0) and ABReLU branches
    for rho in (1, 0.5):
        key, kw = jax.random.split(key)
        weights = init_densenet2_params(kw, inp_dim, hdims, outp_dim, rho=rho)
        prepped = prepare_densenet2_weights(weights)  # one-time transpose+pad
        out = jax.block_until_ready(
            densenet2_forward(x, prepped, outp_dim, rho=rho))
        ref = densenet2_reference(x, weights, rho=rho)
        assert out.shape == (batch, outp_dim), out.shape
        assert jnp.allclose(out, ref, atol=1e-5, rtol=1e-5), (
            f"mismatch vs reference (rho={rho})")

    # leading-dims / reshape path (ModelWithNTK-style [..., inp_dim] inputs)
    key, kx2, kw2 = jax.random.split(key, 3)
    x3 = jax.random.normal(kx2, (2, 3, inp_dim), jnp.float32)
    weights = init_densenet2_params(kw2, inp_dim, hdims, outp_dim, rho=0.5)
    prepped = prepare_densenet2_weights(weights)
    out3 = jax.block_until_ready(
        densenet2_forward(x3, prepped, outp_dim, rho=0.5))
    ref3 = densenet2_reference(x3, weights, rho=0.5)
    assert out3.shape == (2, 3, outp_dim), out3.shape
    assert jnp.allclose(out3, ref3, atol=1e-5, rtol=1e-5), "mismatch (3-D x)"

    print("KERNEL_OK")
</pallas_src>

<mosaic_0001>
module attributes {stable_mosaic.version = 11 : i64} {
  func.func @_densenet2_kernel(%arg0: i32, %arg1: memref<8x128xf32, #tpu.memory_space<vmem>>, %arg2: memref<128x128xf32, #tpu.memory_space<vmem>>, %arg3: memref<128x128xf32, #tpu.memory_space<vmem>>, %arg4: memref<128x128xf32, #tpu.memory_space<vmem>>, %arg5: memref<8x128xf32, #tpu.memory_space<vmem>>) attributes {dimension_semantics = [#tpu.dimension_semantics<parallel>], iteration_bounds = array<i64: 1>, scalar_prefetch = 0 : i64, scratch_operands = 0 : i64, tpu.core_type = #tpu.core_type<tc>, window_params = [{transform_indices = @transform_0, window_bounds = array<i64: 8, 128>}, {pipeline_mode = #tpu.pipeline_mode<synchronous>, transform_indices = @transform_1, window_bounds = array<i64: 128, 128>}, {pipeline_mode = #tpu.pipeline_mode<synchronous>, transform_indices = @transform_2, window_bounds = array<i64: 128, 128>}, {pipeline_mode = #tpu.pipeline_mode<synchronous>, transform_indices = @transform_3, window_bounds = array<i64: 128, 128>}, {transform_indices = @transform_4, window_bounds = array<i64: 8, 128>}]} {
    %c0 = arith.constant 0 : index
    %c0_0 = arith.constant 0 : index
    %0 = vector.load %arg1[%c0, %c0_0] : memref<8x128xf32, #tpu.memory_space<vmem>>, vector<8x128xf32>
    %c0_1 = arith.constant 0 : index
    %c0_2 = arith.constant 0 : index
    %1 = vector.load %arg2[%c0_1, %c0_2] : memref<128x128xf32, #tpu.memory_space<vmem>>, vector<128x128xf32>
    %cst = arith.constant dense<0.000000e+00> : vector<8x128xf32>
    %2 = tpu.matmul %0, %1, %cst {dimension_numbers = #tpu.dot_dimension_numbers<[1], [0], [0], [1], [0, 0, 1, 1], [], []>} : vector<8x128xf32>, vector<128x128xf32>, vector<8x128xf32> -> vector<8x128xf32>
    %cst_3 = arith.constant 0.000000e+00 : f32
    %3 = vector.broadcast %cst_3 : f32 to vector<8x128xf32>
    %4 = arith.maximumf %2, %3 : vector<8x128xf32>
    %c0_4 = arith.constant 0 : index
    %c0_5 = arith.constant 0 : index
    %5 = vector.load %arg3[%c0_4, %c0_5] : memref<128x128xf32, #tpu.memory_space<vmem>>, vector<128x128xf32>
    %cst_6 = arith.constant dense<0.000000e+00> : vector<8x128xf32>
    %6 = tpu.matmul %4, %5, %cst_6 {dimension_numbers = #tpu.dot_dimension_numbers<[1], [0], [0], [1], [0, 0, 1, 1], [], []>} : vector<8x128xf32>, vector<128x128xf32>, vector<8x128xf32> -> vector<8x128xf32>
    %cst_7 = arith.constant 0.000000e+00 : f32
    %7 = vector.broadcast %cst_7 : f32 to vector<8x128xf32>
    %8 = arith.maximumf %6, %7 : vector<8x128xf32>
    %c0_8 = arith.constant 0 : index
    %c0_9 = arith.constant 0 : index
    %9 = vector.load %arg4[%c0_8, %c0_9] : memref<128x128xf32, #tpu.memory_space<vmem>>, vector<128x128xf32>
    %cst_10 = arith.constant dense<0.000000e+00> : vector<8x128xf32>
    %10 = tpu.matmul %8, %9, %cst_10 {dimension_numbers = #tpu.dot_dimension_numbers<[1], [0], [0], [1], [0, 0, 1, 1], [], []>} : vector<8x128xf32>, vector<128x128xf32>, vector<8x128xf32> -> vector<8x128xf32>
    %c0_11 = arith.constant 0 : index
    %c0_12 = arith.constant 0 : index
    %11 = vector.load %arg5[%c0_11, %c0_12] : memref<8x128xf32, #tpu.memory_space<vmem>>, vector<8x128xf32>
    tpu.vector_store %arg5[%c0_11, %c0_12], %10 {strides = array<i32>} : memref<8x128xf32, #tpu.memory_space<vmem>>, vector<8x128xf32>,
    return
  }
  func.func @transform_0(%arg0: i32) -> (i32, i32) {
    %c0_i32 = arith.constant 0 : i32
    %c0_i32_0 = arith.constant 0 : i32
    return %arg0, %c0_i32 : i32, i32
  }
  func.func @transform_1(%arg0: i32) -> (i32, i32) {
    %c0_i32 = arith.constant 0 : i32
    %c0_i32_0 = arith.constant 0 : i32
    %c0_i32_1 = arith.constant 0 : i32
    return %c0_i32, %c0_i32_0 : i32, i32
  }
  func.func @transform_2(%arg0: i32) -> (i32, i32) {
    %c0_i32 = arith.constant 0 : i32
    %c0_i32_0 = arith.constant 0 : i32
    %c0_i32_1 = arith.constant 0 : i32
    return %c0_i32, %c0_i32_0 : i32, i32
  }
  func.func @transform_3(%arg0: i32) -> (i32, i32) {
    %c0_i32 = arith.constant 0 : i32
    %c0_i32_0 = arith.constant 0 : i32
    %c0_i32_1 = arith.constant 0 : i32
    return %c0_i32, %c0_i32_0 : i32, i32
  }
  func.func @transform_4(%arg0: i32) -> (i32, i32) {
    %c0_i32 = arith.constant 0 : i32
    %c0_i32_0 = arith.constant 0 : i32
    return %arg0, %c0_i32 : i32, i32
  }
}

</mosaic_0001>

<llo_original>
// kernel: tpu_custom_call.1
$region0: #{tpu_custom_call.1}
  #allocation0 [shape = 'u32[]', space=smem, size = 0x4, offset = 0x4, fixed_abs, tag = 'smem constant byte address 0x4 - core index']
  #allocation1 [shape = 'u32[72,128]{1,0:T(1,128)}', space=vmem, size = 0x9000, scoped, tag = 'internal scratch']
  %s0 = inlined_call_operand.hbm [shape: f32[8,128], index: 0, kind: input, shape index: {}]
  %s1 = inlined_call_operand.hbm [shape: f32[128,128], index: 1, kind: input, shape index: {}]
  %s2 = inlined_call_operand.hbm [shape: f32[128,128], index: 2, kind: input, shape index: {}]
  %s3 = inlined_call_operand.hbm [shape: f32[128,128], index: 3, kind: input, shape index: {}]
  %s4 = inlined_call_operand.hbm [shape: f32[8,128], index: 4, kind: output, shape index: {}]
  %s5 = sld [smem:[#allocation0]]
  $region42: #{tpu_custom_call.1} parent=0
    _
  %s7 = ssub.s32 1, %s5
  %s8 = scalar_select 0, %s7, %s5
  $region1: #{tpu_custom_call.1} parent=0
    #allocation2 [shape = 'u8[4096]{0}', space=vmem, size = 0x1000, scoped, tag = 'input window, operand 0, single buffered']
    #allocation3 [shape = 's32[1]{0}', space=sflag, size = 0x4, scoped, tag = 'scoped memory for tpu_custom_call.1']
    #allocation4 [shape = 's32[1]{0}', space=sflag, size = 0x4, scoped, tag = 'scoped memory for tpu_custom_call.1']
    #allocation5 [shape = 'u8[65536]{0}', space=vmem, size = 0x10000, scoped, tag = 'input window, operand 1, single buffered']
    #allocation6 [shape = 's32[1]{0}', space=sflag, size = 0x4, scoped, tag = 'scoped memory for tpu_custom_call.1']
    #allocation7 [shape = 'u8[65536]{0}', space=vmem, size = 0x10000, scoped, tag = 'input window, operand 2, single buffered']
    #allocation8 [shape = 'u8[65536]{0}', space=vmem, size = 0x10000, scoped, tag = 'input window, operand 3, single buffered']
    #allocation9 [shape = 's32[1]{0}', space=sflag, size = 0x4, scoped, tag = 'scoped memory for tpu_custom_call.1']
    #allocation10 [shape = 'u8[4096]{0}', space=vmem, size = 0x1000, scoped, tag = 'output window, operand 0, single buffered']
    %9 = vsyncpa [#allocation3], 0
    %10 = vsyncpa [#allocation6], 0
    %11 = vsyncpa [#allocation9], 0
    %12 = vsyncpa [#allocation4], 0
    // Predicated region
    $region2: #{tpu_custom_call.1} parent=1 // pred_check
      _
    $region3: #{tpu_custom_call.1} parent=1 // pred_check_branch
      %14 = sbr.rel (0) target = $region5
    $region4: #{tpu_custom_call.1} parent=1 // pred_region
      %16 = vsyncadd [#allocation3], 0
      %s18 = sshll.u32 %s0, 4
      %s19 = int_to_ptr.hbm [resolvable:$true] %s18
      %s20 = sshll.u32 [#allocation2], 4
      %s21 = int_to_ptr.vmem [resolvable:$true] %s20
      %23 = dma.hbm_to_vmem [thread:$0]  %s19, 128, %s21, [#allocation3]
    $region5: #{tpu_custom_call.1} parent=1 // pred_fallthru
      _
    // Predicated region
    $region6: #{tpu_custom_call.1} parent=1 // pred_check
      _
    $region7: #{tpu_custom_call.1} parent=1 // pred_check_branch
      %25 = sbr.rel (0) target = $region9
    $region8: #{tpu_custom_call.1} parent=1 // pred_region
      %27 = vsyncadd [#allocation6], 0
      %s28 = sshll.u32 %s1, 4
      %s29 = int_to_ptr.hbm [resolvable:$true] %s28
      %s30 = sshll.u32 [#allocation5], 4
      %s31 = int_to_ptr.vmem [resolvable:$true] %s30
      %36 = dma.hbm_to_vmem [thread:$0]  %s29, 2048, %s31, [#allocation6], 128, 128, 8
    $region9: #{tpu_custom_call.1} parent=1 // pred_fallthru
      _
    // Predicated region
    $region10: #{tpu_custom_call.1} parent=1 // pred_check
      _
    $region11: #{tpu_custom_call.1} parent=1 // pred_check_branch
      %38 = sbr.rel (0) target = $region13
    $region12: #{tpu_custom_call.1} parent=1 // pred_region
      %40 = vsyncadd [#allocation6], 0
      %s41 = sshll.u32 %s2, 4
      %s42 = int_to_ptr.hbm [resolvable:$true] %s41
      %s43 = sshll.u32 [#allocation7], 4
      %s44 = int_to_ptr.vmem [resolvable:$true] %s43
      %49 = dma.hbm_to_vmem [thread:$0]  %s42, 2048, %s44, [#allocation6], 128, 128, 8
    $region13: #{tpu_custom_call.1} parent=1 // pred_fallthru
      _
    // Predicated region
    $region14: #{tpu_custom_call.1} parent=1 // pred_check
      _
    $region15: #{tpu_custom_call.1} parent=1 // pred_check_branch
      %51 = sbr.rel (0) target = $region17
    $region16: #{tpu_custom_call.1} parent=1 // pred_region
      %53 = vsyncadd [#allocation9], 0
      %s54 = sshll.u32 %s3, 4
      %s55 = int_to_ptr.hbm [resolvable:$true] %s54
      %s56 = sshll.u32 [#allocation8], 4
      %s57 = int_to_ptr.vmem [resolvable:$true] %s56
      %62 = dma.hbm_to_vmem [thread:$0]  %s55, 2048, %s57, [#allocation9], 128, 128, 8
    $region17: #{tpu_custom_call.1} parent=1 // pred_fallthru
      _
    // Predicated region
    $region18: #{tpu_custom_call.1} parent=1 // pred_check
      _
    $region19: #{tpu_custom_call.1} parent=1 // pred_check_branch
      %64 = sbr.rel (0) target = $region21
    $region20: #{tpu_custom_call.1} parent=1 // pred_region
      %66 = dma.done [#allocation3], 128
    $region21: #{tpu_custom_call.1} parent=1 // pred_fallthru
      _
    // Predicated region
    $region22: #{tpu_custom_call.1} parent=1 // pred_check
      _
    $region23: #{tpu_custom_call.1} parent=1 // pred_check_branch
      %68 = sbr.rel (0) target = $region25
    $region24: #{tpu_custom_call.1} parent=1 // pred_region
      %70 = dma.done [#allocation6], 2048
    $region25: #{tpu_custom_call.1} parent=1 // pred_fallthru
      _
    // Predicated region
    $region26: #{tpu_custom_call.1} parent=1 // pred_check
      _
    $region27: #{tpu_custom_call.1} parent=1 // pred_check_branch
      %72 = sbr.rel (0) target = $region29
    $region28: #{tpu_custom_call.1} parent=1 // pred_region
      %74 = dma.done [#allocation6], 2048
    $region29: #{tpu_custom_call.1} parent=1 // pred_fallthru
      _
    // Predicated region
    $region30: #{tpu_custom_call.1} parent=1 // pred_check
      _
    $region31: #{tpu_custom_call.1} parent=1 // pred_check_branch
      %76 = sbr.rel (0) target = $region33
    $region32: #{tpu_custom_call.1} parent=1 // pred_region
      %78 = dma.done [#allocation9], 2048
    $region33: #{tpu_custom_call.1} parent=1 // pred_fallthru
      _
    %v79 = vld [vmem:[#allocation2] sm:$0xff]
    %v80 = vld [vmem:[#allocation5] sm:$0xff]
    %v81 = vld [vmem:[#allocation5 + $0x8] sm:$0xff]
    %v82 = vld [vmem:[#allocation5 + $0x10] sm:$0xff]
    %v83 = vld [vmem:[#allocation5 + $0x18] sm:$0xff]
    %v84 = vld [vmem:[#allocation5 + $0x20] sm:$0xff]
    %v85 = vld [vmem:[#allocation5 + $0x28] sm:$0xff]
    %v86 = vld [vmem:[#allocation5 + $0x30] sm:$0xff]
    %v87 = vld [vmem:[#allocation5 + $0x38] sm:$0xff]
    %v88 = vld [vmem:[#allocation5 + $0x40] sm:$0xff]
    %v89 = vld [vmem:[#allocation5 + $0x48] sm:$0xff]
    %v90 = vld [vmem:[#allocation5 + $0x50] sm:$0xff]
    %v91 = vld [vmem:[#allocation5 + $0x58] sm:$0xff]
    %v92 = vld [vmem:[#allocation5 + $0x60] sm:$0xff]
    %v93 = vld [vmem:[#allocation5 + $0x68] sm:$0xff]
    %v94 = vld [vmem:[#allocation5 + $0x70] sm:$0xff]
    %v95 = vld [vmem:[#allocation5 + $0x78] sm:$0xff]
    %96 = vmatpush.msra.mxu0 %v95
    %97 = vmatpush.msra.mxu0 %v94
    %98 = vmatpush.msra.mxu0 %v93
    %99 = vmatpush.msra.mxu0 %v92
    %100 = vmatpush.msra.mxu0 %v91
    %101 = vmatpush.msra.mxu0 %v90
    %102 = vmatpush.msra.mxu0 %v89
    %103 = vmatpush.msra.mxu0 %v88
    %104 = vmatpush.msra.mxu0 %v87
    %105 = vmatpush.msra.mxu0 %v86
    %106 = vmatpush.msra.mxu0 %v85
    %107 = vmatpush.msra.mxu0 %v84
    %108 = vmatpush.msra.mxu0 %v83
    %109 = vmatpush.msra.mxu0 %v82
    %110 = vmatpush.msra.mxu0 %v81
    %111 = vmatpush.msra.mxu0 %v80
    %112 = vmatmul.f32.gmra.mxu0 %v79
    %v113 = vpop.f32.mrf.mxu0
    %v114 = vadd.f32 0.0, %v113
    %115 = vdwg.mxu0
    %v116 = vmax.f32 %v114, 0.0
    %v117 = vld [vmem:[#allocation7] sm:$0xff]
    %v118 = vld [vmem:[#allocation7 + $0x8] sm:$0xff]
    %v119 = vld [vmem:[#allocation7 + $0x10] sm:$0xff]
    %v120 = vld [vmem:[#allocation7 + $0x18] sm:$0xff]
    %v121 = vld [vmem:[#allocation7 + $0x20] sm:$0xff]
    %v122 = vld [vmem:[#allocation7 + $0x28] sm:$0xff]
    %v123 = vld [vmem:[#allocation7 + $0x30] sm:$0xff]
    %v124 = vld [vmem:[#allocation7 + $0x38] sm:$0xff]
    %v125 = vld [vmem:[#allocation7 + $0x40] sm:$0xff]
    %v126 = vld [vmem:[#allocation7 + $0x48] sm:$0xff]
    %v127 = vld [vmem:[#allocation7 + $0x50] sm:$0xff]
    %v128 = vld [vmem:[#allocation7 + $0x58] sm:$0xff]
    %v129 = vld [vmem:[#allocation7 + $0x60] sm:$0xff]
    %v130 = vld [vmem:[#allocation7 + $0x68] sm:$0xff]
    %v131 = vld [vmem:[#allocation7 + $0x70] sm:$0xff]
    %v132 = vld [vmem:[#allocation7 + $0x78] sm:$0xff]
    %133 = vmatpush.msra.mxu0 %v132
    %134 = vmatpush.msra.mxu0 %v131
    %135 = vmatpush.msra.mxu0 %v130
    %136 = vmatpush.msra.mxu0 %v129
    %137 = vmatpush.msra.mxu0 %v128
    %138 = vmatpush.msra.mxu0 %v127
    %139 = vmatpush.msra.mxu0 %v126
    %140 = vmatpush.msra.mxu0 %v125
    %141 = vmatpush.msra.mxu0 %v124
    %142 = vmatpush.msra.mxu0 %v123
    %143 = vmatpush.msra.mxu0 %v122
    %144 = vmatpush.msra.mxu0 %v121
    %145 = vmatpush.msra.mxu0 %v120
    %146 = vmatpush.msra.mxu0 %v119
    %147 = vmatpush.msra.mxu0 %v118
    %148 = vmatpush.msra.mxu0 %v117
    %149 = vmatmul.f32.gmra.mxu0 %v116
    %v150 = vpop.f32.mrf.mxu0
    %v151 = vadd.f32 0.0, %v150
    %152 = vdwg.mxu0
    %v153 = vmax.f32 %v151, 0.0
    %v154 = vld [vmem:[#allocation8] sm:$0xff]
    %v155 = vld [vmem:[#allocation8 + $0x8] sm:$0xff]
    %v156 = vld [vmem:[#allocation8 + $0x10] sm:$0xff]
    %v157 = vld [vmem:[#allocation8 + $0x18] sm:$0xff]
    %v158 = vld [vmem:[#allocation8 + $0x20] sm:$0xff]
    %v159 = vld [vmem:[#allocation8 + $0x28] sm:$0xff]
    %v160 = vld [vmem:[#allocation8 + $0x30] sm:$0xff]
    %v161 = vld [vmem:[#allocation8 + $0x38] sm:$0xff]
    %v162 = vld [vmem:[#allocation8 + $0x40] sm:$0xff]
    %v163 = vld [vmem:[#allocation8 + $0x48] sm:$0xff]
    %v164 = vld [vmem:[#allocation8 + $0x50] sm:$0xff]
    %v165 = vld [vmem:[#allocation8 + $0x58] sm:$0xff]
    %v166 = vld [vmem:[#allocation8 + $0x60] sm:$0xff]
    %v167 = vld [vmem:[#allocation8 + $0x68] sm:$0xff]
    %v168 = vld [vmem:[#allocation8 + $0x70] sm:$0xff]
    %v169 = vld [vmem:[#allocation8 + $0x78] sm:$0xff]
    %170 = vmatpush.msra.mxu0 %v169
    %171 = vmatpush.msra.mxu0 %v168
    %172 = vmatpush.msra.mxu0 %v167
    %173 = vmatpush.msra.mxu0 %v166
    %174 = vmatpush.msra.mxu0 %v165
    %175 = vmatpush.msra.mxu0 %v164
    %176 = vmatpush.msra.mxu0 %v163
    %177 = vmatpush.msra.mxu0 %v162
    %178 = vmatpush.msra.mxu0 %v161
    %179 = vmatpush.msra.mxu0 %v160
    %180 = vmatpush.msra.mxu0 %v159
    %181 = vmatpush.msra.mxu0 %v158
    %182 = vmatpush.msra.mxu0 %v157
    %183 = vmatpush.msra.mxu0 %v156
    %184 = vmatpush.msra.mxu0 %v155
    %185 = vmatpush.msra.mxu0 %v154
    %186 = vmatmul.f32.gmra.mxu0 %v153
    %v187 = vpop.f32.mrf.mxu0
    %v188 = vadd.f32 0.0, %v187
    %189 = vdwg.mxu0
    %190 = vst [vmem:[#allocation10] sm:$0xff] %v188
    // Predicated region
    $region34: #{tpu_custom_call.1} parent=1 // pred_check
      _
    $region35: #{tpu_custom_call.1} parent=1 // pred_check_branch
      %192 = sbr.rel (0) target = $region37
    $region36: #{tpu_custom_call.1} parent=1 // pred_region
      %194 = vsyncadd [#allocation4], 0
      %s196 = sshll.u32 [#allocation10], 4
      %s197 = int_to_ptr.vmem [resolvable:$true] %s196
      %s198 = sshll.u32 %s4, 4
      %s199 = int_to_ptr.hbm [resolvable:$true] %s198
      %201 = dma.vmem_to_hbm [thread:$0]  %s197, 128, %s199, [#allocation4]
    $region37: #{tpu_custom_call.1} parent=1 // pred_fallthru
      _
    // Predicated region
    $region38: #{tpu_custom_call.1} parent=1 // pred_check
      _
    $region39: #{tpu_custom_call.1} parent=1 // pred_check_branch
      %203 = sbr.rel (0) target = $region41
    $region40: #{tpu_custom_call.1} parent=1 // pred_region
      %205 = dma.done [#allocation4], 128
    $region41: #{tpu_custom_call.1} parent=1 // pred_fallthru
      _
    %206 = vsyncpa [#allocation3], 1
    %207 = vsyncpa [#allocation6], 1
    %208 = vsyncpa [#allocation9], 1
    %209 = vsyncpa [#allocation4], 1

</llo_original>
